<compile_context>
chip_gen: v6e
topology: v6e:2x2x1
jax: 0.10.0
libtpu: 0.0.40
codegen_flags: <defaults>
</compile_context>

<pallas_src>
import functools
import math

import jax
import jax.numpy as jnp
from jax.experimental import pallas as pl
from jax.experimental.pallas import tpu as pltpu


_LOG2E = 1.4426950408889634
# Explicit VMEM cap with headroom: v7x has 64 MiB physical, v5e/v6e have 128 MiB.
# Leave slack on v7x; on v5e/v6e this can be raised (with larger tiles) if the
# projection kernels show up as memory-bound.
_VMEM_LIMIT = 48 * 1024 * 1024


def _round_up(x, m):
    return (x + m - 1) // m * m


def _pick_tile(m, tile):
    """Largest legal tile <= `tile` (multiple of 8, or the full extent)."""
    t = min(tile, m)
    if t != m and t % 8 != 0:
        t = m
    return t


def _pick_tile_q(lq, tile, batch):
    t = _pick_tile(lq, tile)
    # v7x megacore: make sure the attention grid has >= 2 steps so both
    # TensorCores get work even when batch == 1 and Lq fits in one tile.
    if batch == 1 and t == lq and lq >= 16:
        half = _round_up((lq + 1) // 2, 8)
        if half < lq:
            t = half
    return t


# ----------------------------------------------------------------------------
# Kernel 1: dense layer  y = x @ W + b   (W stored bf16 as (Din, Dout))
# ----------------------------------------------------------------------------
def _linear_kernel(x_ref, w_ref, b_ref, o_ref):
    x = x_ref[...].astype(w_ref.dtype)          # only the activation is cast
    o_ref[...] = (
        jnp.dot(x, w_ref[...], preferred_element_type=jnp.float32) + b_ref[...]
    ).astype(o_ref.dtype)


def linear(x2d, w, b, *, out_dtype=jnp.bfloat16, tile_m=512):
    """x2d: (M, Din), w: (Din, Dout) bf16, b: (1, Dout) f32 -> (M, Dout) out_dtype."""
    M, Din = x2d.shape
    Dout = w.shape[1]
    tm = _pick_tile(M, tile_m)
    return pl.pallas_call(
        _linear_kernel,
        out_shape=jax.ShapeDtypeStruct((M, Dout), out_dtype),
        grid=(pl.cdiv(M, tm),),
        in_specs=[
            pl.BlockSpec((tm, Din), lambda i: (i, 0)),    # activation tile, pipelined
            pl.BlockSpec((Din, Dout), lambda i: (0, 0)),  # bf16 W, resident across grid
            pl.BlockSpec((1, Dout), lambda i: (0, 0)),    # f32 bias, resident
        ],
        out_specs=pl.BlockSpec((tm, Dout), lambda i: (i, 0)),
        compiler_params=pltpu.CompilerParams(
            dimension_semantics=("parallel",),
            vmem_limit_bytes=_VMEM_LIMIT,
        ),
    )(x2d, w, b)


# ----------------------------------------------------------------------------
# Kernel 2: fused K/V projection — two inputs, two outputs, one grid
# (no wrapper-side jnp.stack HBM round-trip)
# ----------------------------------------------------------------------------
def _linear_kv_kernel(k_ref, v_ref, wk_ref, wv_ref, bk_ref, bv_ref, ko_ref, vo_ref):
    ko_ref[...] = (
        jnp.dot(k_ref[...].astype(wk_ref.dtype), wk_ref[...],
                preferred_element_type=jnp.float32) + bk_ref[...]
    ).astype(ko_ref.dtype)
    vo_ref[...] = (
        jnp.dot(v_ref[...].astype(wv_ref.dtype), wv_ref[...],
                preferred_element_type=jnp.float32) + bv_ref[...]
    ).astype(vo_ref.dtype)


def linear_kv(k2d, v2d, wk, wv, bk, bv, *, out_dtype=jnp.bfloat16, tile_m=512):
    M, Din = k2d.shape
    Dout = wk.shape[1]
    tm = _pick_tile(M, tile_m)
    return pl.pallas_call(
        _linear_kv_kernel,
        out_shape=(jax.ShapeDtypeStruct((M, Dout), out_dtype),
                   jax.ShapeDtypeStruct((M, Dout), out_dtype)),
        grid=(pl.cdiv(M, tm),),
        in_specs=[
            pl.BlockSpec((tm, Din), lambda i: (i, 0)),
            pl.BlockSpec((tm, Din), lambda i: (i, 0)),
            pl.BlockSpec((Din, Dout), lambda i: (0, 0)),
            pl.BlockSpec((Din, Dout), lambda i: (0, 0)),
            pl.BlockSpec((1, Dout), lambda i: (0, 0)),
            pl.BlockSpec((1, Dout), lambda i: (0, 0)),
        ],
        out_specs=(pl.BlockSpec((tm, Dout), lambda i: (i, 0)),
                   pl.BlockSpec((tm, Dout), lambda i: (i, 0))),
        compiler_params=pltpu.CompilerParams(
            dimension_semantics=("parallel",),
            vmem_limit_bytes=_VMEM_LIMIT,
        ),
    )(k2d, v2d, wk, wv, bk, bv)


# ----------------------------------------------------------------------------
# Kernel 3: multi-head attention (+ fused output projection) per (batch, Lq-tile)
# ----------------------------------------------------------------------------
def _attn_kernel(q_ref, k_ref, v_ref, wo_ref, bo_ref, x_ref, a_ref, ctx_ref, *,
                 n_heads, head_dim, seq_len):
    s_pad = k_ref.shape[0]
    # Static unroll over heads (n_heads is small). Every per-head temporary ends
    # its life at a ref store, so live ranges stay bounded per iteration.
    for h in range(n_heads):
        lo = h * head_dim
        hi = lo + head_dim
        q_h = q_ref[:, lo:hi]   # bf16 (tq, hd); 1/scale and log2(e) folded into fc_q
        k_h = k_ref[:, lo:hi]   # bf16 (Sp, hd)
        v_h = v_ref[:, lo:hi]   # bf16 (Sp, hd)

        # q_h @ k_h^T on the MXU without a materialized transpose.
        score = jax.lax.dot_general(
            q_h, k_h,
            dimension_numbers=(((1,), (1,)), ((), ())),
            preferred_element_type=jnp.float32,
        )  # (tq, Sp) f32, base-2 logits

        # TODO(synk): optional attention mask (masked_fill) is not wired in here.
        if s_pad != seq_len:
            col = jax.lax.broadcasted_iota(jnp.int32, score.shape, 1)
            score = jnp.where(col < seq_len, score, jnp.float32(-1e30))

        m = jnp.max(score, axis=-1, keepdims=True)
        e = jnp.exp2(score - m)                           # exp via exp2 (log2e pre-folded)
        denom = jnp.sum(e, axis=-1, keepdims=True)
        alpha = e * pl.reciprocal(denom, approx=True)     # EUP reciprocal
        a_ref[h] = alpha[:, :seq_len].astype(a_ref.dtype)

        # Stage per-head context into a bf16 VMEM slab; fc_o runs once below at full
        # contraction width (hid) instead of n_heads tiny-K matmuls.
        ctx_ref[:, lo:hi] = jnp.dot(
            alpha.astype(v_h.dtype), v_h, preferred_element_type=jnp.float32
        ).astype(ctx_ref.dtype)

    # Fused fc_o: concat_h(ctx_h) @ Wo + bo as a single full-width MXU matmul.
    x_ref[...] = (
        jnp.dot(ctx_ref[...], wo_ref[...], preferred_element_type=jnp.float32)
        + bo_ref[...]
    ).astype(x_ref.dtype)


def attention_with_output_proj(Q, K, V, wo, bo, *, n_heads, head_dim, seq_len,
                               tile_q=256, alpha_dtype=jnp.float32,
                               out_dtype=jnp.float32):
    """Q: (B, Lq, hid) bf16 (pre-scaled, base-2 logits), K/V: (B, Sp, hid) bf16,
    wo: (hid, hid) bf16, bo: (1, hid) f32."""
    B, Lq, hid = Q.shape
    Sp = K.shape[1]
    tq = _pick_tile_q(Lq, tile_q, B)
    kernel = functools.partial(_attn_kernel, n_heads=n_heads, head_dim=head_dim,
                               seq_len=seq_len)
    return pl.pallas_call(
        kernel,
        out_shape=(
            jax.ShapeDtypeStruct((B, Lq, hid), out_dtype),
            jax.ShapeDtypeStruct((B, n_heads, Lq, seq_len), alpha_dtype),
        ),
        grid=(B, pl.cdiv(Lq, tq)),
        in_specs=[
            pl.BlockSpec((None, tq, hid), lambda b, i: (b, i, 0)),  # Q tile (heads on lanes)
            pl.BlockSpec((None, Sp, hid), lambda b, i: (b, 0, 0)),  # bf16 K resident per batch
            pl.BlockSpec((None, Sp, hid), lambda b, i: (b, 0, 0)),  # bf16 V resident per batch
            pl.BlockSpec((hid, hid), lambda b, i: (0, 0)),          # bf16 Wo resident
            pl.BlockSpec((1, hid), lambda b, i: (0, 0)),            # f32 bo resident
        ],
        out_specs=(
            pl.BlockSpec((None, tq, hid), lambda b, i: (b, i, 0)),
            pl.BlockSpec((None, n_heads, tq, seq_len), lambda b, i: (b, 0, i, 0)),
        ),
        scratch_shapes=[pltpu.VMEM((tq, hid), jnp.bfloat16)],       # per-step context slab
        compiler_params=pltpu.CompilerParams(
            dimension_semantics=("parallel", "parallel"),
            vmem_limit_bytes=_VMEM_LIMIT,
        ),
    )(Q, K, V, wo, bo)


# ----------------------------------------------------------------------------
# Module wrapper
# ----------------------------------------------------------------------------
class MultiHeadedAttentionComponentPallas:
    def __init__(self, hid_dim, n_heads, audio_dim, key,
                 mxu_dtype=jnp.bfloat16, alpha_dtype=jnp.float32):
        assert hid_dim % n_heads == 0
        self.hid_dim = hid_dim
        self.n_heads = n_heads
        self.head_dim = hid_dim // n_heads
        self.audio_dim = audio_dim
        self.scale = math.sqrt(float(self.head_dim))
        self.alpha_dtype = alpha_dtype

        ks = jax.random.split(key, 8)
        init = lambda k, shape: jax.random.normal(k, shape, jnp.float32) * 0.02
        # f32 master weights (nn.Linear is (out, in); stored transposed for x @ W).
        self.wq = init(ks[0], (hid_dim, hid_dim))
        self.bq = init(ks[1], (hid_dim,))
        self.wk = init(ks[2], (audio_dim, hid_dim))
        self.bk = init(ks[3], (hid_dim,))
        self.wv = init(ks[4], (audio_dim, hid_dim))
        self.bv = init(ks[5], (hid_dim,))
        self.wo = init(ks[6], (hid_dim, hid_dim))
        self.bo = init(ks[7], (hid_dim,))

        # Kernel-side weights: bf16 storage; 1/scale AND log2(e) folded into fc_q so
        # the softmax can use exp2 with no extra multiply.  Biases stay f32 (added
        # in f32 inside the kernels before the bf16 store).
        qs = _LOG2E / self.scale
        self.wq_k = (self.wq * qs).astype(mxu_dtype)
        self.bq_k = (self.bq * qs).reshape(1, hid_dim)
        self.wk_k = self.wk.astype(mxu_dtype)
        self.bk_k = self.bk.reshape(1, hid_dim)
        self.wv_k = self.wv.astype(mxu_dtype)
        self.bv_k = self.bv.reshape(1, hid_dim)
        self.wo_k = self.wo.astype(mxu_dtype)
        self.bo_k = self.bo.reshape(1, hid_dim)

    def __call__(self, query, key, value, mask=None):
        # query: (B, T, H, W, C=hid_dim); key/value: (B, S, audio_dim)
        # Dropout is inference-mode identity.
        # TODO(synk): optional attention mask (masked_fill) is not implemented.
        assert mask is None
        B, T, H, W, C = query.shape
        assert C == self.hid_dim
        S = key.shape[1]
        Lq = T * H * W

        # Pad the key axis to a lane-dense multiple of 128 for score/softmax/PV
        # compute; padded columns are masked inside the kernel and never reach alpha.
        Sp = _round_up(S, 128)
        if Sp != S:
            pad = ((0, 0), (0, Sp - S), (0, 0))
            key = jnp.pad(key, pad)
            value = jnp.pad(value, pad)

        Qp = linear(query.reshape(B * Lq, C), self.wq_k, self.bq_k)        # (B*Lq, hid) bf16
        Kp, Vp = linear_kv(key.reshape(B * Sp, self.audio_dim),
                           value.reshape(B * Sp, self.audio_dim),
                           self.wk_k, self.wv_k, self.bk_k, self.bv_k)     # (B*Sp, hid) bf16

        x, alpha = attention_with_output_proj(
            Qp.reshape(B, Lq, self.hid_dim),
            Kp.reshape(B, Sp, self.hid_dim),
            Vp.reshape(B, Sp, self.hid_dim),
            self.wo_k, self.bo_k,
            n_heads=self.n_heads, head_dim=self.head_dim, seq_len=S,
            alpha_dtype=self.alpha_dtype)
        return x, alpha


# ----------------------------------------------------------------------------
# Pure-JAX f32 reference (for correctness check)
# ----------------------------------------------------------------------------
def reference_forward(mod, query, key, value):
    B, T, H, W, C = query.shape
    S = key.shape[1]
    Lq = T * H * W
    Q = query.reshape(B * Lq, C) @ mod.wq + mod.bq
    K = key.reshape(B * S, -1) @ mod.wk + mod.bk
    V = value.reshape(B * S, -1) @ mod.wv + mod.bv
    nH, hd = mod.n_heads, mod.head_dim
    Q = Q.reshape(B, Lq, nH, hd).transpose(0, 2, 1, 3)
    K = K.reshape(B, S, nH, hd).transpose(0, 2, 1, 3)
    V = V.reshape(B, S, nH, hd).transpose(0, 2, 1, 3)
    score = jnp.einsum("bhqd,bhkd->bhqk", Q, K) / mod.scale
    alpha = jax.nn.softmax(score, axis=-1)
    x = jnp.einsum("bhqk,bhkd->bhqd", alpha, V)
    x = x.transpose(0, 2, 1, 3).reshape(B * Lq, mod.hid_dim)
    x = (x @ mod.wo + mod.bo).reshape(B, Lq, mod.hid_dim)
    return x, alpha


if __name__ == "__main__":
    # Small shapes consistent with the forward pass.
    B, T, H, W = 2, 2, 4, 4
    hid_dim, n_heads, audio_dim, S = 32, 4, 16, 8

    root = jax.random.PRNGKey(0)
    k_param, k_q, k_k, k_v = jax.random.split(root, 4)

    mod = MultiHeadedAttentionComponentPallas(hid_dim, n_heads, audio_dim, k_param)

    query = jax.random.normal(k_q, (B, T, H, W, hid_dim), jnp.float32)
    key = jax.random.normal(k_k, (B, S, audio_dim), jnp.float32)
    value = jax.random.normal(k_v, (B, S, audio_dim), jnp.float32)

    x, alpha = mod(query, key, value)
    jax.block_until_ready(x)
    jax.block_until_ready(alpha)

    x_ref, alpha_ref = reference_forward(mod, query, key, value)
    assert x.shape == (B, T * H * W, hid_dim)
    assert alpha.shape == (B, n_heads, T * H * W, S)
    # Tolerances account for bf16 weights / bf16 Q,K,V intermediates (f32 MXU
    # accumulation) and the approximate (EUP) reciprocal in the softmax denominator.
    assert jnp.allclose(x, x_ref, atol=3e-3, rtol=3e-2)
    assert jnp.allclose(alpha, alpha_ref, atol=3e-3, rtol=3e-2)

    print("KERNEL_OK")
</pallas_src>

<mosaic_0001>
module attributes {stable_mosaic.version = 11 : i64} {
  func.func @_linear_kernel(%arg0: i32, %arg1: memref<64x32xf32, #tpu.memory_space<vmem>>, %arg2: memref<32x32xbf16, #tpu.memory_space<vmem>>, %arg3: memref<1x32xf32, #tpu.memory_space<vmem>>, %arg4: memref<64x32xbf16, #tpu.memory_space<vmem>>) attributes {dimension_semantics = [#tpu.dimension_semantics<parallel>], iteration_bounds = array<i64: 1>, scalar_prefetch = 0 : i64, scratch_operands = 0 : i64, tpu.core_type = #tpu.core_type<tc>, window_params = [{transform_indices = @transform_0, window_bounds = array<i64: 64, 32>}, {pipeline_mode = #tpu.pipeline_mode<synchronous>, transform_indices = @transform_1, window_bounds = array<i64: 32, 32>}, {pipeline_mode = #tpu.pipeline_mode<synchronous>, transform_indices = @transform_2, window_bounds = array<i64: 1, 32>}, {transform_indices = @transform_3, window_bounds = array<i64: 64, 32>}]} {
    %c0 = arith.constant 0 : index
    %c0_0 = arith.constant 0 : index
    %0 = vector.load %arg1[%c0, %c0_0] : memref<64x32xf32, #tpu.memory_space<vmem>>, vector<64x32xf32>
    %1 = arith.truncf %0 : vector<64x32xf32> to vector<64x32xbf16>
    %c0_1 = arith.constant 0 : index
    %c0_2 = arith.constant 0 : index
    %2 = vector.load %arg2[%c0_1, %c0_2] : memref<32x32xbf16, #tpu.memory_space<vmem>>, vector<32x32xbf16>
    %cst = arith.constant dense<0.000000e+00> : vector<64x32xf32>
    %3 = tpu.matmul %1, %2, %cst {dimension_numbers = #tpu.dot_dimension_numbers<[1], [0], [0], [1], [0, 0, 1, 1], [], []>} : vector<64x32xbf16>, vector<32x32xbf16>, vector<64x32xf32> -> vector<64x32xf32>
    %c0_3 = arith.constant 0 : index
    %c0_4 = arith.constant 0 : index
    %4 = vector.load %arg3[%c0_3, %c0_4] : memref<1x32xf32, #tpu.memory_space<vmem>>, vector<1x32xf32>
    %5 = vector.broadcast %4 : vector<1x32xf32> to vector<64x32xf32>
    %6 = arith.addf %3, %5 : vector<64x32xf32>
    %7 = arith.truncf %6 : vector<64x32xf32> to vector<64x32xbf16>
    %c0_5 = arith.constant 0 : index
    %c0_6 = arith.constant 0 : index
    %8 = vector.load %arg4[%c0_5, %c0_6] : memref<64x32xbf16, #tpu.memory_space<vmem>>, vector<64x32xbf16>
    tpu.vector_store %arg4[%c0_5, %c0_6], %7 {strides = array<i32>} : memref<64x32xbf16, #tpu.memory_space<vmem>>, vector<64x32xbf16>,
    return
  }
  func.func @transform_0(%arg0: i32) -> (i32, i32) {
    %c0_i32 = arith.constant 0 : i32
    %c0_i32_0 = arith.constant 0 : i32
    return %arg0, %c0_i32 : i32, i32
  }
  func.func @transform_1(%arg0: i32) -> (i32, i32) {
    %c0_i32 = arith.constant 0 : i32
    %c0_i32_0 = arith.constant 0 : i32
    %c0_i32_1 = arith.constant 0 : i32
    return %c0_i32, %c0_i32_0 : i32, i32
  }
  func.func @transform_2(%arg0: i32) -> (i32, i32) {
    %c0_i32 = arith.constant 0 : i32
    %c0_i32_0 = arith.constant 0 : i32
    %c0_i32_1 = arith.constant 0 : i32
    return %c0_i32, %c0_i32_0 : i32, i32
  }
  func.func @transform_3(%arg0: i32) -> (i32, i32) {
    %c0_i32 = arith.constant 0 : i32
    %c0_i32_0 = arith.constant 0 : i32
    return %arg0, %c0_i32 : i32, i32
  }
}

</mosaic_0001>

<llo_original>
// kernel: tpu_custom_call.1
$region0: #{tpu_custom_call.1}
  #allocation0 [shape = 'u32[]', space=smem, size = 0x4, offset = 0x4, fixed_abs, tag = 'smem constant byte address 0x4 - core index']
  #allocation1 [shape = 'u32[144,128]{1,0:T(1,128)}', space=vmem, size = 0x12000, scoped, tag = 'internal scratch']
  %s0 = inlined_call_operand.vmem [shape: f32[64,32], index: 0, kind: input, shape index: {}]
  %s1 = inlined_call_operand.vmem [shape: bf16[32,32], index: 1, kind: input, shape index: {}]
  %s2 = inlined_call_operand.vmem [shape: f32[1,32], index: 2, kind: input, shape index: {}]
  %s3 = inlined_call_operand.vmem [shape: bf16[64,32], index: 3, kind: output, shape index: {}]
  %s4 = sld [smem:[#allocation0]]
  $region22: #{tpu_custom_call.1} parent=0
    _
  %s6 = ssub.s32 1, %s4
  %s7 = scalar_select 0, %s6, %s4
  // Predicated region
  $region2: #{tpu_custom_call.1} parent=0 // pred_check
    _
  $region3: #{tpu_custom_call.1} parent=0 // pred_check_branch
    %9 = sbr.rel (0) target = $region5
  $region4: #{tpu_custom_call.1} parent=0 // pred_region
    _
  $region5: #{tpu_custom_call.1} parent=0 // pred_fallthru
    _
  // Predicated region
  $region6: #{tpu_custom_call.1} parent=0 // pred_check
    _
  $region7: #{tpu_custom_call.1} parent=0 // pred_check_branch
    %11 = sbr.rel (0) target = $region9
  $region8: #{tpu_custom_call.1} parent=0 // pred_region
    _
  $region9: #{tpu_custom_call.1} parent=0 // pred_fallthru
    _
  // Predicated region
  $region10: #{tpu_custom_call.1} parent=0 // pred_check
    _
  $region11: #{tpu_custom_call.1} parent=0 // pred_check_branch
    %13 = sbr.rel (0) target = $region13
  $region12: #{tpu_custom_call.1} parent=0 // pred_region
    _
  $region13: #{tpu_custom_call.1} parent=0 // pred_fallthru
    _
  %v15 = vld [vmem:[%s0] sm:$0xff]
  %v16 = vld [vmem:[%s0 + $0x8] sm:$0xff]
  %v17 = vld [vmem:[%s0 + $0x10] sm:$0xff]
  %v18 = vld [vmem:[%s0 + $0x18] sm:$0xff]
  %v19 = vld [vmem:[%s0 + $0x20] sm:$0xff]
  %v20 = vld [vmem:[%s0 + $0x28] sm:$0xff]
  %v21 = vld [vmem:[%s0 + $0x30] sm:$0xff]
  %v22 = vld [vmem:[%s0 + $0x38] sm:$0xff]
  %v23 = vpack.c.bf16 %v16, %v15
  %v24 = vpack.c.bf16 %v18, %v17
  %v25 = vpack.c.bf16 %v20, %v19
  %v26 = vpack.c.bf16 %v22, %v21
  %v27 = vld [vmem:[%s1] sm:$0xf]
  %v28 = vld [vmem:[%s1 + $0x4] sm:$0xf]
  %v29 = vld [vmem:[%s1 + $0x8] sm:$0xf]
  %v30 = vld [vmem:[%s1 + $0xc] sm:$0xf]
  %v31 = vld [vmem:[%s2] sm:$0x1]
  %v33 = vlaneseq
  %v34 = vshrl.u32 %v33, 7
  %v35 = vsub.s32 0, %v34
  %v36 = vrot.slane %v31, %v35
  %v42 = vunpack.c.l.b16 %v27
  %v43 = vunpack.c.l.b16 %v28
  %v44 = vunpack.c.l.b16 %v29
  %v45 = vunpack.c.l.b16 %v30
  %v46 = vpack.c.b16 %v43, %v42
  %v47 = vpack.c.b16 %v45, %v44
  %vm50 = vcmask 261120
  %v52 = vsel %vm50, %v23, 0
  %v55 = vsel %vm50, %v24, 0
  %v58 = vsel %vm50, %v25, 0
  %v61 = vsel %vm50, %v26, 0
  %63 = vmatprep.subr.bf16.mxu0 0
  %64 = vmatpush1.bf16.msra.mxu0 0
  %65 = vmatprep.subr.bf16.mxu0 0
  %66 = vmatpush1.bf16.msra.mxu0 0
  %67 = vmatprep.subr.bf16.mxu0 0
  %68 = vmatpush1.bf16.msra.mxu0 0
  %69 = vmatprep.subr.bf16.mxu0 0
  %70 = vmatpush1.bf16.msra.mxu0 0
  %71 = vmatprep.subr.bf16.mxu0 0
  %72 = vmatpush1.bf16.msra.mxu0 0
  %73 = vmatprep.subr.bf16.mxu0 0
  %74 = vmatpush1.bf16.msra.mxu0 0
  %75 = vmatprep.subr.bf16.mxu0 0
  %76 = vmatpush1.bf16.msra.mxu0 %v47
  %77 = vmatprep.subr.bf16.mxu0 0
  %78 = vmatpush1.bf16.msra.mxu0 %v46
  %79 = vmatprep.subr.bf16.mxu0 0
  %80 = vmatpush2.bf16.msra.mxu0 0
  %81 = vmatprep.subr.bf16.mxu0 0
  %82 = vmatpush2.bf16.msra.mxu0 0
  %83 = vmatprep.subr.bf16.mxu0 0
  %84 = vmatpush2.bf16.msra.mxu0 0
  %85 = vmatprep.subr.bf16.mxu0 0
  %86 = vmatpush2.bf16.msra.mxu0 0
  %87 = vmatprep.subr.bf16.mxu0 0
  %88 = vmatpush2.bf16.msra.mxu0 0
  %89 = vmatprep.subr.bf16.mxu0 0
  %90 = vmatpush2.bf16.msra.mxu0 0
  %91 = vmatprep.subr.bf16.mxu0 0
  %92 = vmatpush2.bf16.msra.mxu0 0
  %93 = vmatprep.subr.bf16.mxu0 0
  %94 = vmatpush2.bf16.msra.mxu0 0
  %95 = vmatprep.mubr.bf16.mxu0 0
  %96 = vmatmul.mubr.bf16.gmra.mxu0 %v52
  %v97 = vpop.f32.mrf.mxu0
  %v98 = vadd.f32 %v36, %v97
  %v99 = vpop.f32.mrf.mxu0
  %v100 = vpop.f32.mrf.mxu0
  %v101 = vadd.f32 %v36, %v100
  %v102 = vpop.f32.mrf.mxu0
  %103 = vmatprep.mubr.bf16.mxu0 0
  %104 = vmatmul.mubr.bf16.gmra.mxu0 %v55
  %v105 = vpop.f32.mrf.mxu0
  %v106 = vadd.f32 %v36, %v105
  %v107 = vpop.f32.mrf.mxu0
  %v108 = vpop.f32.mrf.mxu0
  %v109 = vadd.f32 %v36, %v108
  %v110 = vpop.f32.mrf.mxu0
  %111 = vmatprep.mubr.bf16.mxu0 0
  %112 = vmatmul.mubr.bf16.gmra.mxu0 %v58
  %v113 = vpop.f32.mrf.mxu0
  %v114 = vadd.f32 %v36, %v113
  %v115 = vpop.f32.mrf.mxu0
  %v116 = vpop.f32.mrf.mxu0
  %v117 = vadd.f32 %v36, %v116
  %v118 = vpop.f32.mrf.mxu0
  %119 = vmatprep.mubr.bf16.mxu0 0
  %120 = vmatmul.mubr.bf16.gmra.mxu0 %v61
  %v121 = vpop.f32.mrf.mxu0
  %v122 = vadd.f32 %v36, %v121
  %v123 = vpop.f32.mrf.mxu0
  %v124 = vpop.f32.mrf.mxu0
  %v125 = vadd.f32 %v36, %v124
  %v126 = vpop.f32.mrf.mxu0
  %127 = vdwg.mxu0
  %v128 = vpack.c.bf16 %v101, %v98
  %v129 = vpack.c.bf16 %v109, %v106
  %v130 = vpack.c.bf16 %v117, %v114
  %v131 = vpack.c.bf16 %v125, %v122
  %v136 = vunpack.c.l.b16 %v128
  %v137 = vunpack.c.h.b16 %v128
  %v138 = vunpack.c.l.b16 %v129
  %v139 = vunpack.c.h.b16 %v129
  %v140 = vunpack.c.l.b16 %v130
  %v141 = vunpack.c.h.b16 %v130
  %v142 = vunpack.c.l.b16 %v131
  %v143 = vunpack.c.h.b16 %v131
  %v144 = vpack.c.b16 %v136, %v136
  %v145 = vpack.c.b16 %v137, %v137
  %v146 = vpack.c.b16 %v138, %v138
  %v147 = vpack.c.b16 %v139, %v139
  %v148 = vpack.c.b16 %v140, %v140
  %v149 = vpack.c.b16 %v141, %v141
  %v150 = vpack.c.b16 %v142, %v142
  %v151 = vpack.c.b16 %v143, %v143
  %vm160 = vcmask 257024
  %161 = vst.msk [vmem:[%s3] sm:$0xf] %vm160, %v144
  %162 = vst.msk [vmem:[%s3 + $0x4] sm:$0xf] %vm160, %v145
  %163 = vst.msk [vmem:[%s3 + $0x8] sm:$0xf] %vm160, %v146
  %164 = vst.msk [vmem:[%s3 + $0xc] sm:$0xf] %vm160, %v147
  %165 = vst.msk [vmem:[%s3 + $0x10] sm:$0xf] %vm160, %v148
  %166 = vst.msk [vmem:[%s3 + $0x14] sm:$0xf] %vm160, %v149
  %167 = vst.msk [vmem:[%s3 + $0x18] sm:$0xf] %vm160, %v150
  %168 = vst.msk [vmem:[%s3 + $0x1c] sm:$0xf] %vm160, %v151
  // Predicated region
  $region14: #{tpu_custom_call.1} parent=0 // pred_check
    _
  $region15: #{tpu_custom_call.1} parent=0 // pred_check_branch
    %170 = sbr.rel (0) target = $region17
  $region16: #{tpu_custom_call.1} parent=0 // pred_region
    _
  $region17: #{tpu_custom_call.1} parent=0 // pred_fallthru
    _
  // Predicated region
  $region18: #{tpu_custom_call.1} parent=0 // pred_check
    _
  $region19: #{tpu_custom_call.1} parent=0 // pred_check_branch
    %172 = sbr.rel (0) target = $region21
  $region20: #{tpu_custom_call.1} parent=0 // pred_region
    _
  $region21: #{tpu_custom_call.1} parent=0 // pred_fallthru
    _

</llo_original>
